<compile_context>
chip_gen: v6e
topology: v6e:2x2x1
jax: 0.10.0
libtpu: 0.0.40
codegen_flags: <defaults>
</compile_context>

<pallas_src>
import jax
import jax.numpy as jnp
from jax.experimental import pallas as pl
from jax.experimental.pallas import tpu as pltpu


def _logreg_kernel(x_ref, wt_ref, b_ref, o_ref):
    # x_ref: (TB, N) VMEM | wt_ref: (N, 1) VMEM | b_ref: (1,) SMEM | o_ref: (TB, 1) VMEM
    x = x_ref[...]
    wt = wt_ref[...]
    # MXU-native (M=TB, K=N) @ (K=N, N_out=1): K sits on x's lane dim (LHS-native);
    # only the tiny weight column is the RHS, so the big x tile needs no relayout.
    logits = jax.lax.dot_general(
        x, wt,
        dimension_numbers=(((1,), (0,)), ((), ())),
        preferred_element_type=jnp.float32,
    )
    logits = logits + b_ref[0]                     # scalar bias broadcast from SMEM
    o_ref[...] = jax.nn.sigmoid(logits).astype(o_ref.dtype)


def _round_up(n, m):
    return (n + m - 1) // m * m


def _vmem_capacity_bytes():
    try:
        return int(pltpu.get_tpu_info().vmem_capacity_bytes)
    except Exception:
        return 64 * 1024 * 1024  # conservative fallback (v7x per-TC physical VMEM)


def logistic_regression(x, weight, bias, *, block_b=None):
    """sigmoid(x @ weight.T + bias) == torch.sigmoid(nn.Linear(N, 1)(x))."""
    B, N = x.shape
    assert weight.shape == (1, N)
    assert bias.shape == (1,)
    out_dtype = x.dtype

    x_item = jnp.dtype(x.dtype).itemsize
    o_item = jnp.dtype(out_dtype).itemsize

    # Per-generation VMEM ceiling: stay well under the per-TC physical VMEM
    # (64 MiB on v7x, 128 MiB on v5e/v6e).
    vmem_cap = _vmem_capacity_bytes()
    vmem_limit = int(min(vmem_cap // 2, 64 * 1024 * 1024))

    if block_b is None:
        # Lane-padding-aware per-row VMEM cost, double-buffered:
        #   x tile   (TB, N): TB * round_up(N, 128) * itemsize  per buffer
        #   out tile (TB, 1): TB * 128 * itemsize (column layout) per buffer
        per_row = 2 * _round_up(N, 128) * x_item + 2 * 128 * o_item
        budget = (vmem_limit * 3) // 4            # headroom for weight tile + scratch
        tb = budget // per_row
        block_b = int(max(128, (tb // 128) * 128))
    block_b = int(min(block_b, _round_up(B, 8)))
    assert block_b % 8 == 0, "block_b must be a multiple of 8 (sublane granularity)"

    grid = (pl.cdiv(B, block_b),)                 # boundary-tolerant; no host padding

    # (1, N) -> (N, 1): pure metadata reshape on the host; MXU-native RHS layout.
    w_col = weight.reshape(N, 1)

    cost = pl.CostEstimate(
        flops=2 * B * N,
        transcendentals=B,                        # one exp per sigmoid
        bytes_accessed=(B * N + N + 1) * x_item + B * o_item,
    )

    out = pl.pallas_call(
        _logreg_kernel,
        out_shape=jax.ShapeDtypeStruct((B, 1), out_dtype),
        grid=grid,
        in_specs=[
            pl.BlockSpec((block_b, N), lambda i: (i, 0)),        # x batch tile (pipelined)
            pl.BlockSpec((N, 1), lambda i: (0, 0)),              # weight column (resident)
            pl.BlockSpec(memory_space=pltpu.MemorySpace.SMEM),   # bias scalar
        ],
        out_specs=pl.BlockSpec((block_b, 1), lambda i: (i, 0)),  # PyTorch-shaped output
        compiler_params=pltpu.CompilerParams(
            dimension_semantics=("parallel",),    # independent batch tiles
            vmem_limit_bytes=vmem_limit,
        ),
        cost_estimate=cost,
    )(x, w_col, bias)

    return out


if __name__ == "__main__":
    key = jax.random.PRNGKey(0)
    kx, kw, kb = jax.random.split(key, 3)

    batch, num_input = 512, 32
    x = jax.random.normal(kx, (batch, num_input), dtype=jnp.float32)
    # Deterministic params mimicking nn.Linear's uniform(-1/sqrt(N), 1/sqrt(N)) init.
    bound = 1.0 / jnp.sqrt(jnp.float32(num_input))
    weight = jax.random.uniform(kw, (1, num_input), jnp.float32, -bound, bound)
    bias = jax.random.uniform(kb, (1,), jnp.float32, -bound, bound)

    # Multi-tile pipelined path (4 batch tiles).
    out = jax.block_until_ready(logistic_regression(x, weight, bias, block_b=128))
    ref = jax.nn.sigmoid(x @ weight.T + bias)
    assert out.shape == (batch, 1)
    assert jnp.allclose(out, ref, atol=1e-5, rtol=1e-5)

    # Ragged batch: last tile is partial -> exercises boundary masking (no host pad).
    batch2, num_input2 = 300, 20
    x2 = jax.random.normal(kx, (batch2, num_input2), dtype=jnp.float32)
    w2 = jax.random.uniform(kw, (1, num_input2), jnp.float32, -bound, bound)
    out2 = jax.block_until_ready(logistic_regression(x2, w2, bias, block_b=128))
    ref2 = jax.nn.sigmoid(x2 @ w2.T + bias)
    assert out2.shape == (batch2, 1)
    assert jnp.allclose(out2, ref2, atol=1e-5, rtol=1e-5)

    # Auto tile sizing (VMEM-budgeted block_b; single tile at this small batch).
    out3 = jax.block_until_ready(logistic_regression(x, weight, bias))
    assert jnp.allclose(out3, ref, atol=1e-5, rtol=1e-5)

    print("KERNEL_OK")
</pallas_src>

<mosaic_0001>
module attributes {stable_mosaic.version = 11 : i64} {
  func.func @_logreg_kernel(%arg0: i32, %arg1: memref<128x32xf32, #tpu.memory_space<vmem>>, %arg2: memref<32x1xf32, #tpu.memory_space<vmem>>, %arg3: memref<1xf32, #tpu.memory_space<smem>>, %arg4: memref<128x1xf32, #tpu.memory_space<vmem>>) attributes {dimension_semantics = [#tpu.dimension_semantics<parallel>], iteration_bounds = array<i64: 4>, scalar_prefetch = 0 : i64, scratch_operands = 0 : i64, tpu.core_type = #tpu.core_type<tc>, window_params = [{transform_indices = @transform_0, window_bounds = array<i64: 128, 32>}, {pipeline_mode = #tpu.pipeline_mode<synchronous>, transform_indices = @transform_1, window_bounds = array<i64: 32, 1>}, {transform_indices = @transform_2, window_bounds = array<i64: 1>}, {transform_indices = @transform_3, window_bounds = array<i64: 128, 1>}]} {
    %c0 = arith.constant 0 : index
    %c0_0 = arith.constant 0 : index
    %0 = vector.load %arg1[%c0, %c0_0] : memref<128x32xf32, #tpu.memory_space<vmem>>, vector<128x32xf32>
    %c0_1 = arith.constant 0 : index
    %c0_2 = arith.constant 0 : index
    %1 = vector.load %arg2[%c0_1, %c0_2] : memref<32x1xf32, #tpu.memory_space<vmem>>, vector<32x1xf32>
    %cst = arith.constant dense<0.000000e+00> : vector<128x1xf32>
    %2 = tpu.matmul %0, %1, %cst {dimension_numbers = #tpu.dot_dimension_numbers<[1], [0], [0], [1], [0, 0, 1, 1], [], []>} : vector<128x32xf32>, vector<32x1xf32>, vector<128x1xf32> -> vector<128x1xf32>
    %c0_3 = arith.constant 0 : index
    %3 = memref.load %arg3[%c0_3] : memref<1xf32, #tpu.memory_space<smem>>
    %4 = vector.broadcast %3 : f32 to vector<128x1xf32>
    %5 = arith.addf %2, %4 : vector<128x1xf32>
    %6 = arith.negf %5 : vector<128x1xf32>
    %7 = math.exp %6 : vector<128x1xf32>
    %cst_4 = arith.constant 1.000000e+00 : f32
    %8 = vector.broadcast %cst_4 : f32 to vector<128x1xf32>
    %9 = arith.addf %8, %7 : vector<128x1xf32>
    %10 = arith.divf %8, %9 : vector<128x1xf32>
    %c0_5 = arith.constant 0 : index
    %c0_6 = arith.constant 0 : index
    %11 = vector.load %arg4[%c0_5, %c0_6] : memref<128x1xf32, #tpu.memory_space<vmem>>, vector<128x1xf32>
    tpu.vector_store %arg4[%c0_5, %c0_6], %10 {strides = array<i32>} : memref<128x1xf32, #tpu.memory_space<vmem>>, vector<128x1xf32>,
    return
  }
  func.func @transform_0(%arg0: i32) -> (i32, i32) {
    %c0_i32 = arith.constant 0 : i32
    %c0_i32_0 = arith.constant 0 : i32
    return %arg0, %c0_i32 : i32, i32
  }
  func.func @transform_1(%arg0: i32) -> (i32, i32) {
    %c0_i32 = arith.constant 0 : i32
    %c0_i32_0 = arith.constant 0 : i32
    %c0_i32_1 = arith.constant 0 : i32
    return %c0_i32, %c0_i32_0 : i32, i32
  }
  func.func @transform_2(%arg0: i32) -> i32 {
    %c0_i32 = arith.constant 0 : i32
    %c0_i32_0 = arith.constant 0 : i32
    return %c0_i32 : i32
  }
  func.func @transform_3(%arg0: i32) -> (i32, i32) {
    %c0_i32 = arith.constant 0 : i32
    %c0_i32_0 = arith.constant 0 : i32
    return %arg0, %c0_i32 : i32, i32
  }
}

</mosaic_0001>

<llo_original>
// kernel: tpu_custom_call.1
$region0: #{tpu_custom_call.1}
  #allocation0 [shape = 'u32[]', space=smem, size = 0x4, offset = 0x4, fixed_abs, tag = 'smem constant byte address 0x4 - core index']
  #allocation1 [shape = 'u32[144,128]{1,0:T(1,128)}', space=vmem, size = 0x12000, scoped, tag = 'internal scratch']
  #allocation2 [shape = 'f32[1]{0:T(128)S(6)}', space=smem, size = 0x200, scoped, tag = 'scoped memory for tpu_custom_call.1']
  %s0 = inlined_call_operand.vmem [shape: f32[512,32], index: 0, kind: input, shape index: {}]
  %s1 = inlined_call_operand.vmem [shape: f32[32,1], index: 1, kind: input, shape index: {}]
  %s2 = inlined_call_operand.<no memory space> [shape: f32[1], index: 2, kind: input, shape index: {}]
  %s3 = inlined_call_operand.vmem [shape: f32[512,1], index: 3, kind: output, shape index: {}]
  %s4 = sld [smem:[#allocation0]]
  $region45: #{tpu_custom_call.1} parent=0
    _
  %s6 = ssub.s32 1, %s4
  %s7 = scalar_select 0, %s6, %s4
  %8 = sst [smem:[#allocation2]] %s2
  loop: start=0, step=1, limit=6
  $region2: #{tpu_custom_call.1} parent=0 // loop_pre_header
    _
  $region3: #{tpu_custom_call.1} parent=0 // loop_header
    %s10 = sphi 0, %s14
    %p11 = scmp.ge.s32.totalorder %s10, 6
    %s20 = sphi 0, %s22
    %s23 = sphi 0, %s20
    %s24 = sphi 0, %s23
    %s40 = sphi 0, %s24
    %s44 = sphi 0, %s44
    %s46 = sphi 0, %s44
    %s47 = sphi 0, %s46
    %s61 = sphi 0, %s47
    %s65 = sphi 0, %s65
    %s67 = sphi 0, %s65
    %s68 = sphi 0, %s67
    %s82 = sphi 0, %s68
    %s88 = sphi 0, %s90
    %s91 = sphi 0, %s88
    %s92 = sphi 0, %s91
    %s108 = sphi 0, %s92
  $region4: #{tpu_custom_call.1} parent=0 // loop_header_branch
    %13 = sbr.rel (%p11) target = $region8
  $region5: #{tpu_custom_call.1} parent=0 // loop_body
    %s15 = ssub.s32 %s10, 1
    %s16 = ssub.s32 %s10, 2
    %s17 = sadd.s32 %s10, 1
    %s18 = ssub.s32 %s10, %s17
    %p19 = scmp.eq.s32.totalorder %s18, 0
    %s21 = sadd.s32 %s20, 1
    %s22 = scalar_select %p19, %s20, %s21
    %p25 = pneg %p19
    %p26 = scmp.eq.s32.totalorder %s10, 3
    %p27 = por %p25, %p26
    %p28 = scmp.ne.s32.totalorder %s20, %s23
    %p29 = scmp.eq.s32.totalorder %s10, 0
    %p30 = por %p28, %p29
    %p31 = scmp.ne.s32.totalorder %s20, %s23
    %p32 = scmp.eq.s32.totalorder %s15, 3
    %p33 = por %p31, %p32
    %p34 = scmp.ne.s32.totalorder %s23, %s24
    %p35 = scmp.eq.s32.totalorder %s15, 0
    %p36 = por %p34, %p35
    %p37 = scmp.ne.s32.totalorder %s23, %s24
    %p38 = scmp.eq.s32.totalorder %s16, 3
    %p39 = por %p37, %p38
    %p41 = scmp.ne.s32.totalorder %s24, %s40
    %p42 = scmp.eq.s32.totalorder %s16, 0
    %p43 = por %p41, %p42
    %s45 = sadd.s32 %s44, 1
    %p48 = scmp.eq.s32.totalorder %s10, 3
    %p49 = scmp.ne.s32.totalorder %s44, %s46
    %p50 = scmp.eq.s32.totalorder %s10, 0
    %p51 = por %p49, %p50
    %p52 = scmp.ne.s32.totalorder %s44, %s46
    %p53 = scmp.eq.s32.totalorder %s15, 3
    %p54 = por %p52, %p53
    %p55 = scmp.ne.s32.totalorder %s46, %s47
    %p56 = scmp.eq.s32.totalorder %s15, 0
    %p57 = por %p55, %p56
    %p58 = scmp.ne.s32.totalorder %s46, %s47
    %p59 = scmp.eq.s32.totalorder %s16, 3
    %p60 = por %p58, %p59
    %p62 = scmp.ne.s32.totalorder %s47, %s61
    %p63 = scmp.eq.s32.totalorder %s16, 0
    %p64 = por %p62, %p63
    %s66 = sadd.s32 %s65, 1
    %p69 = scmp.eq.s32.totalorder %s10, 3
    %p70 = scmp.ne.s32.totalorder %s65, %s67
    %p71 = scmp.eq.s32.totalorder %s10, 0
    %p72 = por %p70, %p71
    %p73 = scmp.ne.s32.totalorder %s65, %s67
    %p74 = scmp.eq.s32.totalorder %s15, 3
    %p75 = por %p73, %p74
    %p76 = scmp.ne.s32.totalorder %s67, %s68
    %p77 = scmp.eq.s32.totalorder %s15, 0
    %p78 = por %p76, %p77
    %p79 = scmp.ne.s32.totalorder %s67, %s68
    %p80 = scmp.eq.s32.totalorder %s16, 3
    %p81 = por %p79, %p80
    %p83 = scmp.ne.s32.totalorder %s68, %s82
    %p84 = scmp.eq.s32.totalorder %s16, 0
    %p85 = por %p83, %p84
    %s86 = ssub.s32 %s10, %s17
    %p87 = scmp.eq.s32.totalorder %s86, 0
    %s89 = sadd.s32 %s88, 1
    %s90 = scalar_select %p87, %s88, %s89
    %p93 = pneg %p87
    %p94 = scmp.eq.s32.totalorder %s10, 3
    %p95 = por %p93, %p94
    %p96 = scmp.ne.s32.totalorder %s88, %s91
    %p97 = scmp.eq.s32.totalorder %s10, 0
    %p98 = por %p96, %p97
    %p99 = scmp.ne.s32.totalorder %s88, %s91
    %p100 = scmp.eq.s32.totalorder %s15, 3
    %p101 = por %p99, %p100
    %p102 = scmp.ne.s32.totalorder %s91, %s92
    %p103 = scmp.eq.s32.totalorder %s15, 0
    %p104 = por %p102, %p103
    %p105 = scmp.ne.s32.totalorder %s91, %s92
    %p106 = scmp.eq.s32.totalorder %s16, 3
    %p107 = por %p105, %p106
    %p109 = scmp.ne.s32.totalorder %s92, %s108
    %p110 = scmp.eq.s32.totalorder %s16, 0
    %p111 = por %p109, %p110
    %p112 = scmp.le.s32.totalorder 1, %s10
    %p113 = scmp.lt.s32.totalorder %s10, 5
    %p114 = pnand %p112, %p113
    %p115 = pneg %p114
    // Predicated region
    $region9: #{tpu_custom_call.1} parent=5 // pred_check
      _
    $region10: #{tpu_custom_call.1} parent=5 // pred_check_branch
      %117 = sbr.rel (%p114) target = $region12
    $region11: #{tpu_custom_call.1} parent=5 // pred_region
      %s118 = ssub.s32 %s10, 1
      // Predicated region
      $region13: #{tpu_custom_call.1} parent=11 // pred_check
        %p119 = pneg %p57
      $region14: #{tpu_custom_call.1} parent=11 // pred_check_branch
        %121 = sbr.rel (%p119) target = $region16
      $region15: #{tpu_custom_call.1} parent=11 // pred_region
        _
      $region16: #{tpu_custom_call.1} parent=11 // pred_fallthru
        _
      // Predicated region
      $region17: #{tpu_custom_call.1} parent=11 // pred_check
        %p122 = pneg %p78
      $region18: #{tpu_custom_call.1} parent=11 // pred_check_branch
        %124 = sbr.rel (%p122) target = $region20
      $region19: #{tpu_custom_call.1} parent=11 // pred_region
        _
      $region20: #{tpu_custom_call.1} parent=11 // pred_fallthru
        _
    $region12: #{tpu_custom_call.1} parent=5 // pred_fallthru
      _
    %p125 = scmp.lt.s32.totalorder %s10, 4
    // Predicated region
    $region21: #{tpu_custom_call.1} parent=5 // pred_check
      %p126 = pneg %p125
    $region22: #{tpu_custom_call.1} parent=5 // pred_check_branch
      %128 = sbr.rel (%p126) target = $region24
    $region23: #{tpu_custom_call.1} parent=5 // pred_region
      // Predicated region
      $region25: #{tpu_custom_call.1} parent=23 // pred_check
        %p129 = pneg %p30
      $region26: #{tpu_custom_call.1} parent=23 // pred_check_branch
        %131 = sbr.rel (%p129) target = $region28
      $region27: #{tpu_custom_call.1} parent=23 // pred_region
        %s132 = smul.u32 16, %s10
        %p133 = scmp.lt.s32.totalorder %s132, 63
        %s134 = scalar_select %p133, %s132, 63
        %s135 = smul.addr %s134, 8
        %s136 = scalar_lea.vmem %s0, %s135
        %s137 = smul.u32 16, %s10
      $region28: #{tpu_custom_call.1} parent=23 // pred_fallthru
        _
    $region24: #{tpu_custom_call.1} parent=5 // pred_fallthru
      _
    %p138 = scmp.le.s32.totalorder 1, %s10
    %p139 = scmp.lt.s32.totalorder %s10, 5
    %p140 = pnand %p138, %p139
    %p141 = pneg %p140
    // Predicated region
    $region29: #{tpu_custom_call.1} parent=5 // pred_check
      _
    $region30: #{tpu_custom_call.1} parent=5 // pred_check_branch
      %143 = sbr.rel (%p140) target = $region32
    $region31: #{tpu_custom_call.1} parent=5 // pred_region
      %s144 = ssub.s32 %s10, 1
      %s145 = smul.u32 16, %s15
      %p146 = scmp.lt.s32.totalorder %s145, 63
      %s147 = scalar_select %p146, %s145, 63
      %s148 = smul.addr %s147, 8
      %s149 = scalar_lea.vmem %s0, %s148
      %p150 = pneg %p36
      %p151 = pneg %p33
      %p152 = pneg %p57
      %p153 = pneg %p54
      %p154 = pneg %p78
      %p155 = pneg %p75
      %p156 = pneg %p104
      %p157 = pneg %p101
      %s158 = smul.u32 16, %s15
      %p159 = scmp.lt.s32.totalorder %s158, 63
      %s160 = scalar_select %p159, %s158, 63
      %s161 = smul.addr %s160, 8
      %s162 = scalar_lea.vmem %s3, %s161
      %s163 = smul.u32 16, %s15
      %p164 = scmp.lt.s32.totalorder %s163, 63
      %s165 = scalar_select %p164, %s163, 63
      %s166 = smul.addr %s165, 8
      %s167 = scalar_lea.vmem %s0, %s166
      %s168 = smul.u32 16, %s15
      %s169 = smul.u32 16, %s15
      %p170 = scmp.lt.s32.totalorder %s169, 63
      %s171 = scalar_select %p170, %s169, 63
      %s172 = smul.addr %s171, 8
      %s173 = scalar_lea.vmem %s3, %s172
      %s174 = smul.u32 16, %s15
      %v175 = vld [vmem:[%s167] sm:$0xff]
      %v176 = vld [vmem:[%s167 + $0x8] sm:$0xff]
      %v177 = vld [vmem:[%s167 + $0x10] sm:$0xff]
      %v178 = vld [vmem:[%s167 + $0x18] sm:$0xff]
      %v179 = vld [vmem:[%s167 + $0x20] sm:$0xff]
      %v180 = vld [vmem:[%s167 + $0x28] sm:$0xff]
      %v181 = vld [vmem:[%s167 + $0x30] sm:$0xff]
      %v182 = vld [vmem:[%s167 + $0x38] sm:$0xff]
      %v183 = vld [vmem:[%s167 + $0x40] sm:$0xff]
      %v184 = vld [vmem:[%s167 + $0x48] sm:$0xff]
      %v185 = vld [vmem:[%s167 + $0x50] sm:$0xff]
      %v186 = vld [vmem:[%s167 + $0x58] sm:$0xff]
      %v187 = vld [vmem:[%s167 + $0x60] sm:$0xff]
      %v188 = vld [vmem:[%s167 + $0x68] sm:$0xff]
      %v189 = vld [vmem:[%s167 + $0x70] sm:$0xff]
      %v190 = vld [vmem:[%s167 + $0x78] sm:$0xff]
      %v191 = vld [vmem:[%s1] sm:$0xff]
      %v192 = vld [vmem:[%s1 + $0x8] sm:$0xff]
      %v193 = vld [vmem:[%s1 + $0x10] sm:$0xff]
      %v194 = vld [vmem:[%s1 + $0x18] sm:$0xff]
      %s195 = sld [smem:[#allocation2]]
      %v196 = vstv %s195
      %vm197 = vcmask 261120
      %v199 = vsel %vm197, %v175, 0
      %v202 = vsel %vm197, %v176, 0
      %v205 = vsel %vm197, %v177, 0
      %v208 = vsel %vm197, %v178, 0
      %v211 = vsel %vm197, %v179, 0
      %v214 = vsel %vm197, %v180, 0
      %v217 = vsel %vm197, %v181, 0
      %v220 = vsel %vm197, %v182, 0
      %v223 = vsel %vm197, %v183, 0
      %v226 = vsel %vm197, %v184, 0
      %v229 = vsel %vm197, %v185, 0
      %v232 = vsel %vm197, %v186, 0
      %v235 = vsel %vm197, %v187, 0
      %v238 = vsel %vm197, %v188, 0
      %v241 = vsel %vm197, %v189, 0
      %v244 = vsel %vm197, %v190, 0
      %246 = vmatprep.subr.mxu0 0.0
      %247 = vmatpush1.msra.mxu0 0.0
      %248 = vmatprep.subr.mxu0 0.0
      %249 = vmatpush1.msra.mxu0 0.0
      %250 = vmatprep.subr.mxu0 0.0
      %251 = vmatpush1.msra.mxu0 0.0
      %252 = vmatprep.subr.mxu0 0.0
      %253 = vmatpush1.msra.mxu0 0.0
      %254 = vmatprep.subr.mxu0 0.0
      %255 = vmatpush1.msra.mxu0 0.0
      %256 = vmatprep.subr.mxu0 0.0
      %257 = vmatpush1.msra.mxu0 0.0
      %258 = vmatprep.subr.mxu0 0.0
      %259 = vmatpush1.msra.mxu0 0.0
      %260 = vmatprep.subr.mxu0 0.0
      %261 = vmatpush1.msra.mxu0 0.0
      %262 = vmatprep.subr.mxu0 0.0
      %263 = vmatpush1.msra.mxu0 0.0
      %264 = vmatprep.subr.mxu0 0.0
      %265 = vmatpush1.msra.mxu0 0.0
      %266 = vmatprep.subr.mxu0 0.0
      %267 = vmatpush1.msra.mxu0 0.0
      %268 = vmatprep.subr.mxu0 0.0
      %269 = vmatpush1.msra.mxu0 0.0
      %270 = vmatprep.subr.mxu0 0.0
      %271 = vmatpush1.msra.mxu0 %v194
      %272 = vmatprep.subr.mxu0 0.0
      %273 = vmatpush1.msra.mxu0 %v193
      %274 = vmatprep.subr.mxu0 0.0
      %275 = vmatpush1.msra.mxu0 %v192
      %276 = vmatprep.subr.mxu0 0.0
      %277 = vmatpush1.msra.mxu0 %v191
      %278 = vmatprep.subr.mxu0 0.0
      %279 = vmatpush2.msra.mxu0 0.0
      %280 = vmatprep.subr.mxu0 0.0
      %281 = vmatpush2.msra.mxu0 0.0
      %282 = vmatprep.subr.mxu0 0.0
      %283 = vmatpush2.msra.mxu0 0.0
      %284 = vmatprep.subr.mxu0 0.0
      %285 = vmatpush2.msra.mxu0 0.0
      %286 = vmatprep.subr.mxu0 0.0
      %287 = vmatpush2.msra.mxu0 0.0
      %288 = vmatprep.subr.mxu0 0.0
      %289 = vmatpush2.msra.mxu0 0.0
      %290 = vmatprep.subr.mxu0 0.0
      %291 = vmatpush2.msra.mxu0 0.0
      %292 = vmatprep.subr.mxu0 0.0
      %293 = vmatpush2.msra.mxu0 0.0
      %294 = vmatprep.subr.mxu0 0.0
      %295 = vmatpush2.msra.mxu0 0.0
      %296 = vmatprep.subr.mxu0 0.0
      %297 = vmatpush2.msra.mxu0 0.0
      %298 = vmatprep.subr.mxu0 0.0
      %299 = vmatpush2.msra.mxu0 0.0
      %300 = vmatprep.subr.mxu0 0.0
      %301 = vmatpush2.msra.mxu0 0.0
      %302 = vmatprep.subr.mxu0 0.0
      %303 = vmatpush2.msra.mxu0 0.0
      %304 = vmatprep.subr.mxu0 0.0
      %305 = vmatpush2.msra.mxu0 0.0
      %306 = vmatprep.subr.mxu0 0.0
      %307 = vmatpush2.msra.mxu0 0.0
      %308 = vmatprep.subr.mxu0 0.0
      %309 = vmatpush2.msra.mxu0 0.0
      %310 = vmatprep.mubr.f32.mxu0 0.0
      %311 = vmatmul.mubr.f32.gmra.mxu0 %v199
      %v312 = vpop.f32.mrf.mxu0
      %v313 = vadd.f32 %v196, %v312
      %v314 = vpop.f32.mrf.mxu0
      %315 = vmatprep.mubr.f32.mxu0 0.0
      %316 = vmatmul.mubr.f32.gmra.mxu0 %v202
      %v317 = vpop.f32.mrf.mxu0
      %v318 = vadd.f32 %v196, %v317
      %v319 = vpop.f32.mrf.mxu0
      %320 = vmatprep.mubr.f32.mxu0 0.0
      %321 = vmatmul.mubr.f32.gmra.mxu0 %v205
      %v322 = vpop.f32.mrf.mxu0
      %v323 = vadd.f32 %v196, %v322
      %v324 = vpop.f32.mrf.mxu0
      %325 = vmatprep.mubr.f32.mxu0 0.0
      %326 = vmatmul.mubr.f32.gmra.mxu0 %v208
      %v327 = vpop.f32.mrf.mxu0
      %v328 = vadd.f32 %v196, %v327
      %v329 = vpop.f32.mrf.mxu0
      %330 = vmatprep.mubr.f32.mxu0 0.0
      %331 = vmatmul.mubr.f32.gmra.mxu0 %v211
      %v332 = vpop.f32.mrf.mxu0
      %v333 = vadd.f32 %v196, %v332
      %v334 = vpop.f32.mrf.mxu0
      %335 = vmatprep.mubr.f32.mxu0 0.0
      %336 = vmatmul.mubr.f32.gmra.mxu0 %v214
      %v337 = vpop.f32.mrf.mxu0
      %v338 = vadd.f32 %v196, %v337
      %v339 = vpop.f32.mrf.mxu0
      %340 = vmatprep.mubr.f32.mxu0 0.0
      %341 = vmatmul.mubr.f32.gmra.mxu0 %v217
      %v342 = vpop.f32.mrf.mxu0
      %v343 = vadd.f32 %v196, %v342
      %v344 = vpop.f32.mrf.mxu0
      %345 = vmatprep.mubr.f32.mxu0 0.0
      %346 = vmatmul.mubr.f32.gmra.mxu0 %v220
      %v347 = vpop.f32.mrf.mxu0
      %v348 = vadd.f32 %v196, %v347
      %v349 = vpop.f32.mrf.mxu0
      %350 = vmatprep.mubr.f32.mxu0 0.0
      %351 = vmatmul.mubr.f32.gmra.mxu0 %v223
      %v352 = vpop.f32.mrf.mxu0
      %v353 = vadd.f32 %v196, %v352
      %v354 = vpop.f32.mrf.mxu0
      %355 = vmatprep.mubr.f32.mxu0 0.0
      %356 = vmatmul.mubr.f32.gmra.mxu0 %v226
      %v357 = vpop.f32.mrf.mxu0
      %v358 = vadd.f32 %v196, %v357
      %v359 = vpop.f32.mrf.mxu0
      %360 = vmatprep.mubr.f32.mxu0 0.0
      %361 = vmatmul.mubr.f32.gmra.mxu0 %v229
      %v362 = vpop.f32.mrf.mxu0
      %v363 = vadd.f32 %v196, %v362
      %v364 = vpop.f32.mrf.mxu0
      %365 = vmatprep.mubr.f32.mxu0 0.0
      %366 = vmatmul.mubr.f32.gmra.mxu0 %v232
      %v367 = vpop.f32.mrf.mxu0
      %v368 = vadd.f32 %v196, %v367
      %v369 = vpop.f32.mrf.mxu0
      %370 = vmatprep.mubr.f32.mxu0 0.0
      %371 = vmatmul.mubr.f32.gmra.mxu0 %v235
      %v372 = vpop.f32.mrf.mxu0
      %v373 = vadd.f32 %v196, %v372
      %v374 = vpop.f32.mrf.mxu0
      %375 = vmatprep.mubr.f32.mxu0 0.0
      %376 = vmatmul.mubr.f32.gmra.mxu0 %v238
      %v377 = vpop.f32.mrf.mxu0
      %v378 = vadd.f32 %v196, %v377
      %v379 = vpop.f32.mrf.mxu0
      %380 = vmatprep.mubr.f32.mxu0 0.0
      %381 = vmatmul.mubr.f32.gmra.mxu0 %v241
      %v382 = vpop.f32.mrf.mxu0
      %v383 = vadd.f32 %v196, %v382
      %v384 = vpop.f32.mrf.mxu0
      %385 = vmatprep.mubr.f32.mxu0 0.0
      %386 = vmatmul.mubr.f32.gmra.mxu0 %v244
      %v387 = vpop.f32.mrf.mxu0
      %v388 = vadd.f32 %v196, %v387
      %v389 = vpop.f32.mrf.mxu0
      %390 = vdwg.mxu0
      %v391 = vxor.u32 %v313, 2147483648
      %v392 = vxor.u32 %v318, 2147483648
      %v393 = vxor.u32 %v323, 2147483648
      %v394 = vxor.u32 %v328, 2147483648
      %v395 = vxor.u32 %v333, 2147483648
      %v396 = vxor.u32 %v338, 2147483648
      %v397 = vxor.u32 %v343, 2147483648
      %v398 = vxor.u32 %v348, 2147483648
      %v399 = vxor.u32 %v353, 2147483648
      %v400 = vxor.u32 %v358, 2147483648
      %v401 = vxor.u32 %v363, 2147483648
      %v402 = vxor.u32 %v368, 2147483648
      %v403 = vxor.u32 %v373, 2147483648
      %v404 = vxor.u32 %v378, 2147483648
      %v405 = vxor.u32 %v383, 2147483648
      %v406 = vxor.u32 %v388, 2147483648
      %v407 = vmul.f32 %v391, 1.442695
      %v408 = vpow.pop %v407
      %v409 = vmul.f32 %v392, 1.442695
      %v410 = vpow.pop %v409
      %v411 = vmul.f32 %v393, 1.442695
      %v412 = vpow.pop %v411
      %v413 = vmul.f32 %v394, 1.442695
      %v414 = vpow.pop %v413
      %v415 = vmul.f32 %v395, 1.442695
      %v416 = vpow.pop %v415
      %v417 = vmul.f32 %v396, 1.442695
      %v418 = vpow.pop %v417
      %v419 = vmul.f32 %v397, 1.442695
      %v420 = vpow.pop %v419
      %v421 = vmul.f32 %v398, 1.442695
      %v422 = vpow.pop %v421
      %v423 = vmul.f32 %v399, 1.442695
      %v424 = vpow.pop %v423
      %v425 = vmul.f32 %v400, 1.442695
      %v426 = vpow.pop %v425
      %v427 = vmul.f32 %v401, 1.442695
      %v428 = vpow.pop %v427
      %v429 = vmul.f32 %v402, 1.442695
      %v430 = vpow.pop %v429
      %v431 = vmul.f32 %v403, 1.442695
      %v432 = vpow.pop %v431
      %v433 = vmul.f32 %v404, 1.442695
      %v434 = vpow.pop %v433
      %v435 = vmul.f32 %v405, 1.442695
      %v436 = vpow.pop %v435
      %v437 = vmul.f32 %v406, 1.442695
      %v438 = vpow.pop %v437
      %v439 = vadd.f32 %v408, 1.0
      %v440 = vadd.f32 %v410, 1.0
      %v441 = vadd.f32 %v412, 1.0
      %v442 = vadd.f32 %v414, 1.0
      %v443 = vadd.f32 %v416, 1.0
      %v444 = vadd.f32 %v418, 1.0
      %v445 = vadd.f32 %v420, 1.0
      %v446 = vadd.f32 %v422, 1.0
      %v447 = vadd.f32 %v424, 1.0
      %v448 = vadd.f32 %v426, 1.0
      %v449 = vadd.f32 %v428, 1.0
      %v450 = vadd.f32 %v430, 1.0
      %v451 = vadd.f32 %v432, 1.0
      %v452 = vadd.f32 %v434, 1.0
      %v453 = vadd.f32 %v436, 1.0
      %v454 = vadd.f32 %v438, 1.0
      %v455 = vrcp.pop %v439
      %v456 = vmul.f32 1.0, %v455
      %v457 = vrcp.pop %v440
      %v458 = vmul.f32 1.0, %v457
      %v459 = vrcp.pop %v441
      %v460 = vmul.f32 1.0, %v459
      %v461 = vrcp.pop %v442
      %v462 = vmul.f32 1.0, %v461
      %v463 = vrcp.pop %v443
      %v464 = vmul.f32 1.0, %v463
      %v465 = vrcp.pop %v444
      %v466 = vmul.f32 1.0, %v465
      %v467 = vrcp.pop %v445
      %v468 = vmul.f32 1.0, %v467
      %v469 = vrcp.pop %v446
      %v470 = vmul.f32 1.0, %v469
      %v471 = vrcp.pop %v447
      %v472 = vmul.f32 1.0, %v471
      %v473 = vrcp.pop %v448
      %v474 = vmul.f32 1.0, %v473
      %v475 = vrcp.pop %v449
      %v476 = vmul.f32 1.0, %v475
      %v477 = vrcp.pop %v450
      %v478 = vmul.f32 1.0, %v477
      %v479 = vrcp.pop %v451
      %v480 = vmul.f32 1.0, %v479
      %v481 = vrcp.pop %v452
      %v482 = vmul.f32 1.0, %v481
      %v483 = vrcp.pop %v453
      %v484 = vmul.f32 1.0, %v483
      %v485 = vrcp.pop %v454
      %v486 = vmul.f32 1.0, %v485
      %vm487 = vcmask 7168
      %488 = vst.msk [vmem:[%s173] sm:$0xff] %vm487, %v456
      %489 = vst.msk [vmem:[%s173 + $0x8] sm:$0xff] %vm487, %v458
      %490 = vst.msk [vmem:[%s173 + $0x10] sm:$0xff] %vm487, %v460
      %491 = vst.msk [vmem:[%s173 + $0x18] sm:$0xff] %vm487, %v462
      %492 = vst.msk [vmem:[%s173 + $0x20] sm:$0xff] %vm487, %v464
      %493 = vst.msk [vmem:[%s173 + $0x28] sm:$0xff] %vm487, %v466
      %494 = vst.msk [vmem:[%s173 + $0x30] sm:$0xff] %vm487, %v468
      %495 = vst.msk [vmem:[%s173 + $0x38] sm:$0xff] %vm487, %v470
      %496 = vst.msk [vmem:[%s173 + $0x40] sm:$0xff] %vm487, %v472
      %497 = vst.msk [vmem:[%s173 + $0x48] sm:$0xff] %vm487, %v474
      %498 = vst.msk [vmem:[%s173 + $0x50] sm:$0xff] %vm487, %v476
      %499 = vst.msk [vmem:[%s173 + $0x58] sm:$0xff] %vm487, %v478
      %500 = vst.msk [vmem:[%s173 + $0x60] sm:$0xff] %vm487, %v480
      %501 = vst.msk [vmem:[%s173 + $0x68] sm:$0xff] %vm487, %v482
      %502 = vst.msk [vmem:[%s173 + $0x70] sm:$0xff] %vm487, %v484
      %503 = vst.msk [vmem:[%s173 + $0x78] sm:$0xff] %vm487, %v486
      %s504 = smul.u32 16, %s15
      %p505 = scmp.lt.s32.totalorder %s504, 63
      %s506 = scalar_select %p505, %s504, 63
      %s507 = smul.addr %s506, 8
      %s508 = scalar_lea.vmem %s3, %s507
      // Predicated region
      $region33: #{tpu_custom_call.1} parent=31 // pred_check
        %p509 = pneg %p101
      $region34: #{tpu_custom_call.1} parent=31 // pred_check_branch
        %511 = sbr.rel (%p509) target = $region36
      $region35: #{tpu_custom_call.1} parent=31 // pred_region
        %s512 = smul.u32 16, %s15
      $region36: #{tpu_custom_call.1} parent=31 // pred_fallthru
        _
    $region32: #{tpu_custom_call.1} parent=5 // pred_fallthru
      _
    %p513 = scmp.le.s32.totalorder 2, %s10
    // Predicated region
    $region37: #{tpu_custom_call.1} parent=5 // pred_check
      %p514 = pneg %p513
    $region38: #{tpu_custom_call.1} parent=5 // pred_check_branch
      %516 = sbr.rel (%p514) target = $region40
    $region39: #{tpu_custom_call.1} parent=5 // pred_region
      %s517 = ssub.s32 %s10, 2
      // Predicated region
      $region41: #{tpu_custom_call.1} parent=39 // pred_check
        %p518 = pneg %p107
      $region42: #{tpu_custom_call.1} parent=39 // pred_check_branch
        %520 = sbr.rel (%p518) target = $region44
      $region43: #{tpu_custom_call.1} parent=39 // pred_region
        %s521 = smul.u32 16, %s16
        %p522 = scmp.lt.s32.totalorder %s521, 63
        %s523 = scalar_select %p522, %s521, 63
        %s524 = smul.addr %s523, 8
        %s525 = scalar_lea.vmem %s3, %s524
      $region44: #{tpu_custom_call.1} parent=39 // pred_fallthru
        _
    $region40: #{tpu_custom_call.1} parent=5 // pred_fallthru
      _
  $region6: #{tpu_custom_call.1} parent=0 // loop_footer
    %s14 = sadd.s32 1, %s10
  $region7: #{tpu_custom_call.1} parent=0 // loop_footer_branch
    %9 = sbr.rel target = $region3
  $region8: #{tpu_custom_call.1} parent=0 // loop_exit
    _

</llo_original>
